<compile_context>
chip_gen: v5e
topology: v5e:2x2
jax: 0.10.0
libtpu: 0.0.40
codegen_flags: <defaults>
</compile_context>

<pallas_src>
import functools
import math

import jax
import jax.numpy as jnp
from jax import lax
from jax.experimental import pallas as pl
from jax.experimental.pallas import tpu as pltpu

_C1 = 2.0 * math.sqrt(2.0 / math.pi)       # 2*sqrt(2/pi)
_C2 = 0.044715 * _C1


def _mvgelu_kernel(x_ref, o_ref, *, K, group):
    """x_ref/o_ref: (tile_rows, W) with W = group * K; lane j*K of each row is
    the scalar component of multivector j of that row."""
    xf = x_ref[...].astype(jnp.float32)

    if group == 1:
        # One multivector per row: scalar is lane 0, broadcast along lanes.
        s = xf[:, 0:1]
        gate = 1.0 / (1.0 + jnp.exp(-(s * (_C1 + _C2 * (s * s)))))
        o_ref[...] = (gate * xf).astype(o_ref.dtype)
        return

    # Lane-dense path: W == 128 and K is a power of two.  Keep only the scalar
    # lanes, then a windowed sum of width K (log2(K) roll+add steps on the XLU)
    # places each group's scalar value on all K of its lanes.
    lane = lax.broadcasted_iota(jnp.int32, xf.shape, 1)
    s = jnp.where((lane & (K - 1)) == 0, xf, 0.0)
    shift = 1
    while shift < K:
        s = s + pltpu.roll(s, shift, axis=1)
        shift *= 2

    gate = 1.0 / (1.0 + jnp.exp(-(s * (_C1 + _C2 * (s * s)))))
    o_ref[...] = (gate * xf).astype(o_ref.dtype)


def mvgelu(x, *, block_bytes=2 * 1024 * 1024):
    """Apply MVGELU. x: (..., K) with component 0 as the scalar part."""
    orig_shape = x.shape
    K = orig_shape[-1]
    total = x.size
    if total == 0:
        return x

    # Lane-dense view when possible (K | 128 and the flat size packs evenly);
    # otherwise fall back to one multivector per row.
    if K <= 128 and 128 % K == 0 and total % 128 == 0:
        W = 128
    else:
        W = K
    group = W // K
    R = total // W
    x2 = x.reshape(R, W)

    # Row tile from a byte budget (multiple of 8 sublanes).  Ragged tails are
    # handled by a cdiv grid + Pallas masking; small arrays use one full-extent
    # block (always legal), never an oversized one.
    row_bytes = W * x.dtype.itemsize
    tile_r = max(8, (block_bytes // row_bytes) // 8 * 8)
    if R <= tile_r:
        tile_r = R
    grid = (pl.cdiv(R, tile_r),)

    kernel = functools.partial(_mvgelu_kernel, K=K, group=group)
    out = pl.pallas_call(
        kernel,
        out_shape=jax.ShapeDtypeStruct((R, W), x.dtype),
        grid_spec=pltpu.PrefetchScalarGridSpec(
            num_scalar_prefetch=0,
            grid=grid,
            in_specs=[pl.BlockSpec((tile_r, W), lambda i: (i, 0))],
            out_specs=pl.BlockSpec((tile_r, W), lambda i: (i, 0)),
        ),
        compiler_params=pltpu.CompilerParams(
            dimension_semantics=("parallel",),
            vmem_limit_bytes=32 * 1024 * 1024,
        ),
    )(x2)
    return out.reshape(orig_shape)


def _mvgelu_ref(x):
    xf = x.astype(jnp.float32)
    s = xf[..., 0]
    gate = jax.nn.sigmoid(math.sqrt(2.0 / math.pi) * (2.0 * (s + 0.044715 * s ** 3)))
    return (gate[..., None] * xf).astype(x.dtype)


if __name__ == "__main__":
    key = jax.random.PRNGKey(0)
    k1, k2, k3, k4 = jax.random.split(key, 4)

    # Primary case: batch=2, seq=8, points=16, multivector components K=16.
    x = jax.random.normal(k1, (2, 8, 16, 16), dtype=jnp.float32)
    out = jax.block_until_ready(mvgelu(x))
    ref = _mvgelu_ref(x)
    assert out.shape == x.shape and out.dtype == x.dtype
    assert jnp.allclose(out, ref, atol=1e-5, rtol=1e-5), "f32 mismatch"

    # Multi-block grid with a ragged last block (tiny block budget forces grid>1).
    x_r = jax.random.normal(k2, (2, 9, 16, 16), dtype=jnp.float32)
    out_r = jax.block_until_ready(mvgelu(x_r, block_bytes=8 * 128 * 4))
    assert jnp.allclose(out_r, _mvgelu_ref(x_r), atol=1e-5, rtol=1e-5), "ragged mismatch"

    # bf16 input: gate computed in f32, only the final product is cast back.
    x_b = jax.random.normal(k3, (2, 8, 16, 16), dtype=jnp.bfloat16)
    out_b = jax.block_until_ready(mvgelu(x_b))
    assert out_b.dtype == jnp.bfloat16
    assert jnp.allclose(out_b.astype(jnp.float32),
                        _mvgelu_ref(x_b).astype(jnp.float32),
                        atol=2e-2, rtol=2e-2), "bf16 mismatch"

    # Fallback path (K does not divide 128).
    x_f = jax.random.normal(k4, (5, 7), dtype=jnp.float32)
    out_f = jax.block_until_ready(mvgelu(x_f))
    assert jnp.allclose(out_f, _mvgelu_ref(x_f), atol=1e-5, rtol=1e-5), "fallback mismatch"

    print("KERNEL_OK")
</pallas_src>

<mosaic_0001>
module attributes {stable_mosaic.version = 11 : i64} {
  func.func @_mvgelu_kernel(%arg0: i32, %arg1: memref<32x128xf32, #tpu.memory_space<vmem>>, %arg2: memref<32x128xf32, #tpu.memory_space<vmem>>) attributes {dimension_semantics = [#tpu.dimension_semantics<parallel>], iteration_bounds = array<i64: 1>, scalar_prefetch = 0 : i64, scratch_operands = 0 : i64, tpu.core_type = #tpu.core_type<tc>, window_params = [{transform_indices = @transform_0, window_bounds = array<i64: 32, 128>}, {transform_indices = @transform_1, window_bounds = array<i64: 32, 128>}]} {
    %c0 = arith.constant 0 : index
    %c0_0 = arith.constant 0 : index
    %0 = vector.load %arg1[%c0, %c0_0] : memref<32x128xf32, #tpu.memory_space<vmem>>, vector<32x128xf32>
    %1 = tpu.iota {dimensions = array<i32: 1>} : vector<32x128xi32>
    %c15_i32 = arith.constant 15 : i32
    %2 = vector.broadcast %c15_i32 : i32 to vector<32x128xi32>
    %3 = arith.andi %1, %2 : vector<32x128xi32>
    %c0_i32 = arith.constant 0 : i32
    %4 = vector.broadcast %c0_i32 : i32 to vector<32x128xi32>
    %5 = arith.cmpi eq, %3, %4 : vector<32x128xi32>
    %cst = arith.constant 0.000000e+00 : f32
    %6 = vector.broadcast %cst : f32 to vector<32x128xf32>
    %7 = arith.select %5, %0, %6 : vector<32x128xi1>, vector<32x128xf32>
    %c1_i32 = arith.constant 1 : i32
    %8 = tpu.dynamic_rotate %7 by %c1_i32 dim 1 : vector<32x128xf32>, i32 -> vector<32x128xf32>
    %9 = arith.addf %7, %8 : vector<32x128xf32>
    %c2_i32 = arith.constant 2 : i32
    %10 = tpu.dynamic_rotate %9 by %c2_i32 dim 1 : vector<32x128xf32>, i32 -> vector<32x128xf32>
    %11 = arith.addf %9, %10 : vector<32x128xf32>
    %c4_i32 = arith.constant 4 : i32
    %12 = tpu.dynamic_rotate %11 by %c4_i32 dim 1 : vector<32x128xf32>, i32 -> vector<32x128xf32>
    %13 = arith.addf %11, %12 : vector<32x128xf32>
    %c8_i32 = arith.constant 8 : i32
    %14 = tpu.dynamic_rotate %13 by %c8_i32 dim 1 : vector<32x128xf32>, i32 -> vector<32x128xf32>
    %15 = arith.addf %13, %14 : vector<32x128xf32>
    %16 = arith.mulf %15, %15 : vector<32x128xf32>
    %cst_1 = arith.constant 0.0713548139 : f32
    %17 = vector.broadcast %cst_1 : f32 to vector<32x128xf32>
    %18 = arith.mulf %17, %16 : vector<32x128xf32>
    %cst_2 = arith.constant 1.59576917 : f32
    %19 = vector.broadcast %cst_2 : f32 to vector<32x128xf32>
    %20 = arith.addf %19, %18 : vector<32x128xf32>
    %21 = arith.mulf %15, %20 : vector<32x128xf32>
    %cst_3 = arith.constant 0.000000e+00 : f32
    %22 = vector.broadcast %cst_3 : f32 to vector<32x128xf32>
    %23 = arith.subf %22, %21 : vector<32x128xf32>
    %24 = math.exp %23 : vector<32x128xf32>
    %cst_4 = arith.constant 1.000000e+00 : f32
    %25 = vector.broadcast %cst_4 : f32 to vector<32x128xf32>
    %26 = arith.addf %25, %24 : vector<32x128xf32>
    %cst_5 = arith.constant 1.000000e+00 : f32
    %27 = vector.broadcast %cst_5 : f32 to vector<32x128xf32>
    %28 = arith.divf %27, %26 : vector<32x128xf32>
    %29 = arith.mulf %28, %0 : vector<32x128xf32>
    %c0_6 = arith.constant 0 : index
    %c0_7 = arith.constant 0 : index
    %30 = vector.load %arg2[%c0_6, %c0_7] : memref<32x128xf32, #tpu.memory_space<vmem>>, vector<32x128xf32>
    tpu.vector_store %arg2[%c0_6, %c0_7], %29 {strides = array<i32>} : memref<32x128xf32, #tpu.memory_space<vmem>>, vector<32x128xf32>,
    return
  }
  func.func @transform_0(%arg0: i32) -> (i32, i32) {
    %c0_i32 = arith.constant 0 : i32
    %c0_i32_0 = arith.constant 0 : i32
    return %arg0, %c0_i32 : i32, i32
  }
  func.func @transform_1(%arg0: i32) -> (i32, i32) {
    %c0_i32 = arith.constant 0 : i32
    %c0_i32_0 = arith.constant 0 : i32
    return %arg0, %c0_i32 : i32, i32
  }
}

</mosaic_0001>

<llo_original>
// kernel: tpu_custom_call.1
$region0: #{tpu_custom_call.1}
  #allocation0 [shape = 'u32[]', space=smem, size = 0x4, offset = 0x4, fixed_abs, tag = 'smem constant byte address 0x4 - core index']
  #allocation1 [shape = 'u32[72,128]{1,0:T(1,128)}', space=vmem, size = 0x9000, scoped, tag = 'internal scratch']
  %s0 = inlined_call_operand.hbm [shape: f32[32,128], index: 0, kind: input, shape index: {}]
  %s1 = inlined_call_operand.hbm [shape: f32[32,128], index: 1, kind: output, shape index: {}]
  %s2 = sld [smem:[#allocation0]]
  $region18: #{tpu_custom_call.1} parent=0
    _
  %s4 = ssub.s32 1, %s2
  %s5 = scalar_select 0, %s4, %s2
  $region1: #{tpu_custom_call.1} parent=0
    #allocation2 [shape = 'u8[16384]{0}', space=vmem, size = 0x4000, scoped, tag = 'input window, operand 0, single buffered']
    #allocation3 [shape = 's32[1]{0}', space=sflag, size = 0x4, scoped, tag = 'scoped memory for tpu_custom_call.1']
    #allocation4 [shape = 's32[1]{0}', space=sflag, size = 0x4, scoped, tag = 'scoped memory for tpu_custom_call.1']
    #allocation5 [shape = 'u8[16384]{0}', space=vmem, size = 0x4000, scoped, tag = 'output window, operand 0, single buffered']
    %6 = vsyncpa [#allocation3], 0
    %7 = vsyncpa [#allocation4], 0
    // Predicated region
    $region2: #{tpu_custom_call.1} parent=1 // pred_check
      _
    $region3: #{tpu_custom_call.1} parent=1 // pred_check_branch
      %9 = sbr.rel (0) target = $region5
    $region4: #{tpu_custom_call.1} parent=1 // pred_region
      %11 = vsyncadd [#allocation3], 0
      %s12 = sshll.u32 %s0, 4
      %s13 = int_to_ptr.hbm [resolvable:$true] %s12
      %s14 = sshll.u32 [#allocation2], 4
      %s15 = int_to_ptr.vmem [resolvable:$true] %s14
      %20 = dma.hbm_to_vmem [thread:$0]  %s13, 512, %s15, [#allocation3], 128, 128, 8
    $region5: #{tpu_custom_call.1} parent=1 // pred_fallthru
      _
    // Predicated region
    $region6: #{tpu_custom_call.1} parent=1 // pred_check
      _
    $region7: #{tpu_custom_call.1} parent=1 // pred_check_branch
      %22 = sbr.rel (0) target = $region9
    $region8: #{tpu_custom_call.1} parent=1 // pred_region
      %24 = dma.done [#allocation3], 512
    $region9: #{tpu_custom_call.1} parent=1 // pred_fallthru
      _
    %v25 = vld [vmem:[#allocation2] sm:$0xff]
    %v26 = vld [vmem:[#allocation2 + $0x8] sm:$0xff]
    %v27 = vld [vmem:[#allocation2 + $0x10] sm:$0xff]
    %v28 = vld [vmem:[#allocation2 + $0x18] sm:$0xff]
    %v29 = vlaneseq
    %v30 = vand.u32 %v29, 127
    %v31 = vand.u32 %v30, 15
    %vm32 = vcmp.eq.s32.totalorder %v31, 0
    %v33 = vsel %vm32, %v25, 0.0
    %v34 = vsel %vm32, %v26, 0.0
    %v35 = vsel %vm32, %v27, 0.0
    %v36 = vsel %vm32, %v28, 0.0
    %37 = vrot.lane.b32.xlu0 %v33, 1
    %v38 = vpop.permute.xlu0 %37
    %39 = vrot.lane.b32.xlu0 %v34, 1
    %v40 = vpop.permute.xlu0 %39
    %41 = vrot.lane.b32.xlu0 %v35, 1
    %v42 = vpop.permute.xlu0 %41
    %43 = vrot.lane.b32.xlu0 %v36, 1
    %v44 = vpop.permute.xlu0 %43
    %v45 = vadd.f32 %v33, %v38
    %v46 = vadd.f32 %v34, %v40
    %v47 = vadd.f32 %v35, %v42
    %v48 = vadd.f32 %v36, %v44
    %49 = vrot.lane.b32.xlu0 %v45, 2
    %v50 = vpop.permute.xlu0 %49
    %51 = vrot.lane.b32.xlu0 %v46, 2
    %v52 = vpop.permute.xlu0 %51
    %53 = vrot.lane.b32.xlu0 %v47, 2
    %v54 = vpop.permute.xlu0 %53
    %55 = vrot.lane.b32.xlu0 %v48, 2
    %v56 = vpop.permute.xlu0 %55
    %v57 = vadd.f32 %v45, %v50
    %v58 = vadd.f32 %v46, %v52
    %v59 = vadd.f32 %v47, %v54
    %v60 = vadd.f32 %v48, %v56
    %61 = vrot.lane.b32.xlu0 %v57, 4
    %v62 = vpop.permute.xlu0 %61
    %63 = vrot.lane.b32.xlu0 %v58, 4
    %v64 = vpop.permute.xlu0 %63
    %65 = vrot.lane.b32.xlu0 %v59, 4
    %v66 = vpop.permute.xlu0 %65
    %67 = vrot.lane.b32.xlu0 %v60, 4
    %v68 = vpop.permute.xlu0 %67
    %v69 = vadd.f32 %v57, %v62
    %v70 = vadd.f32 %v58, %v64
    %v71 = vadd.f32 %v59, %v66
    %v72 = vadd.f32 %v60, %v68
    %73 = vrot.lane.b32.xlu0 %v69, 8
    %v74 = vpop.permute.xlu0 %73
    %75 = vrot.lane.b32.xlu0 %v70, 8
    %v76 = vpop.permute.xlu0 %75
    %77 = vrot.lane.b32.xlu0 %v71, 8
    %v78 = vpop.permute.xlu0 %77
    %79 = vrot.lane.b32.xlu0 %v72, 8
    %v80 = vpop.permute.xlu0 %79
    %v81 = vadd.f32 %v69, %v74
    %v82 = vadd.f32 %v70, %v76
    %v83 = vadd.f32 %v71, %v78
    %v84 = vadd.f32 %v72, %v80
    %v85 = vmul.f32 %v81, %v81
    %v86 = vmul.f32 %v82, %v82
    %v87 = vmul.f32 %v83, %v83
    %v88 = vmul.f32 %v84, %v84
    %v89 = vmul.f32 %v85, 0.071354814
    %v90 = vmul.f32 %v86, 0.071354814
    %v91 = vmul.f32 %v87, 0.071354814
    %v92 = vmul.f32 %v88, 0.071354814
    %v93 = vadd.f32 %v89, 1.5957692
    %v94 = vadd.f32 %v90, 1.5957692
    %v95 = vadd.f32 %v91, 1.5957692
    %v96 = vadd.f32 %v92, 1.5957692
    %v97 = vmul.f32 %v81, %v93
    %v98 = vmul.f32 %v82, %v94
    %v99 = vmul.f32 %v83, %v95
    %v100 = vmul.f32 %v84, %v96
    %v101 = vsub.f32 0.0, %v97
    %v102 = vsub.f32 0.0, %v98
    %v103 = vsub.f32 0.0, %v99
    %v104 = vsub.f32 0.0, %v100
    %v105 = vmul.f32 %v101, 1.442695
    %v106 = vpow.pop %v105
    %v107 = vmul.f32 %v102, 1.442695
    %v108 = vpow.pop %v107
    %v109 = vmul.f32 %v103, 1.442695
    %v110 = vpow.pop %v109
    %v111 = vmul.f32 %v104, 1.442695
    %v112 = vpow.pop %v111
    %v113 = vadd.f32 %v106, 1.0
    %v114 = vadd.f32 %v108, 1.0
    %v115 = vadd.f32 %v110, 1.0
    %v116 = vadd.f32 %v112, 1.0
    %v117 = vrcp.pop %v113
    %v118 = vmul.f32 %v113, %v117
    %v119 = vsub.f32 1.0, %v118
    %v120 = vmul.f32 %v117, %v119
    %v121 = vadd.f32 %v117, %v120
    %vm122 = vweird.f32 %v113
    %vm123 = vweird.f32 %v117
    %vm124 = vmor %vm122, %vm123
    %v125 = vsel %vm124, %v117, %v121
    %v126 = vand.u32 2147483647, %v113
    %vm127 = vcmp.eq.f32.partialorder %v126, 8.507059e+37
    %v128 = vand.u32 %v113, 2147483648
    %v129 = vor.u32 1.1754944e-38, %v128
    %v130 = vsel %vm127, %v129, %v125
    %v131 = vmul.f32 1.0, %v130
    %v132 = vrcp.pop %v114
    %v133 = vmul.f32 %v114, %v132
    %v134 = vsub.f32 1.0, %v133
    %v135 = vmul.f32 %v132, %v134
    %v136 = vadd.f32 %v132, %v135
    %vm137 = vweird.f32 %v114
    %vm138 = vweird.f32 %v132
    %vm139 = vmor %vm137, %vm138
    %v140 = vsel %vm139, %v132, %v136
    %v141 = vand.u32 2147483647, %v114
    %vm142 = vcmp.eq.f32.partialorder %v141, 8.507059e+37
    %v143 = vand.u32 %v114, 2147483648
    %v144 = vor.u32 1.1754944e-38, %v143
    %v145 = vsel %vm142, %v144, %v140
    %v146 = vmul.f32 1.0, %v145
    %v147 = vrcp.pop %v115
    %v148 = vmul.f32 %v115, %v147
    %v149 = vsub.f32 1.0, %v148
    %v150 = vmul.f32 %v147, %v149
    %v151 = vadd.f32 %v147, %v150
    %vm152 = vweird.f32 %v115
    %vm153 = vweird.f32 %v147
    %vm154 = vmor %vm152, %vm153
    %v155 = vsel %vm154, %v147, %v151
    %v156 = vand.u32 2147483647, %v115
    %vm157 = vcmp.eq.f32.partialorder %v156, 8.507059e+37
    %v158 = vand.u32 %v115, 2147483648
    %v159 = vor.u32 1.1754944e-38, %v158
    %v160 = vsel %vm157, %v159, %v155
    %v161 = vmul.f32 1.0, %v160
    %v162 = vrcp.pop %v116
    %v163 = vmul.f32 %v116, %v162
    %v164 = vsub.f32 1.0, %v163
    %v165 = vmul.f32 %v162, %v164
    %v166 = vadd.f32 %v162, %v165
    %vm167 = vweird.f32 %v116
    %vm168 = vweird.f32 %v162
    %vm169 = vmor %vm167, %vm168
    %v170 = vsel %vm169, %v162, %v166
    %v171 = vand.u32 2147483647, %v116
    %vm172 = vcmp.eq.f32.partialorder %v171, 8.507059e+37
    %v173 = vand.u32 %v116, 2147483648
    %v174 = vor.u32 1.1754944e-38, %v173
    %v175 = vsel %vm172, %v174, %v170
    %v176 = vmul.f32 1.0, %v175
    %v177 = vmul.f32 %v131, %v25
    %v178 = vmul.f32 %v146, %v26
    %v179 = vmul.f32 %v161, %v27
    %v180 = vmul.f32 %v176, %v28
    %181 = vst [vmem:[#allocation5] sm:$0xff] %v177
    %182 = vst [vmem:[#allocation5 + $0x8] sm:$0xff] %v178
    %183 = vst [vmem:[#allocation5 + $0x10] sm:$0xff] %v179
    %184 = vst [vmem:[#allocation5 + $0x18] sm:$0xff] %v180
    // Predicated region
    $region10: #{tpu_custom_call.1} parent=1 // pred_check
      _
    $region11: #{tpu_custom_call.1} parent=1 // pred_check_branch
      %186 = sbr.rel (0) target = $region13
    $region12: #{tpu_custom_call.1} parent=1 // pred_region
      %188 = vsyncadd [#allocation4], 0
      %s189 = sshll.u32 [#allocation5], 4
      %s190 = int_to_ptr.vmem [resolvable:$true] %s189
      %s191 = sshll.u32 %s1, 4
      %s192 = int_to_ptr.hbm [resolvable:$true] %s191
      %197 = dma.vmem_to_hbm [thread:$0]  %s190, 512, %s192, [#allocation4], 128, 128, 8
    $region13: #{tpu_custom_call.1} parent=1 // pred_fallthru
      _
    // Predicated region
    $region14: #{tpu_custom_call.1} parent=1 // pred_check
      _
    $region15: #{tpu_custom_call.1} parent=1 // pred_check_branch
      %199 = sbr.rel (0) target = $region17
    $region16: #{tpu_custom_call.1} parent=1 // pred_region
      %201 = dma.done [#allocation4], 512
    $region17: #{tpu_custom_call.1} parent=1 // pred_fallthru
      _
    %202 = vsyncpa [#allocation3], 1
    %203 = vsyncpa [#allocation4], 1

</llo_original>
